<compile_context>
chip_gen: v5e
topology: v5e:2x2
jax: 0.10.0
libtpu: 0.0.40
codegen_flags: <defaults>
</compile_context>

<pallas_src>
import jax
import jax.numpy as jnp
from jax.experimental import pallas as pl
from jax.experimental.pallas import tpu as pltpu


def _kernel_out_acc(x_ref, w_ref, diag_ref, bias_ref, o_ref):
    """f32 output: accumulate directly into the resident output block."""
    j = pl.program_id(1)
    k = pl.program_id(2)

    @pl.when(k == 0)
    def _init():
        o_ref[...] = jnp.zeros_like(o_ref)

    o_ref[...] += jnp.dot(
        x_ref[...], w_ref[...], preferred_element_type=jnp.float32
    )

    @pl.when(k == j)
    def _diag():
        # With tk == tn, the K tile at step k == j covers exactly the columns of
        # the current N tile, so the diagonal term x[:, n] * W[n, n] is removed
        # here without a separate x input stream.
        o_ref[...] -= (
            x_ref[...].astype(jnp.float32) * diag_ref[...].astype(jnp.float32)
        )

    @pl.when(k == pl.num_programs(2) - 1)
    def _bias():
        o_ref[...] += bias_ref[...].astype(jnp.float32)


def _kernel_scratch_acc(x_ref, w_ref, diag_ref, bias_ref, o_ref, acc_ref):
    """Low-precision output: f32 scratch accumulator + cast on finalize."""
    j = pl.program_id(1)
    k = pl.program_id(2)

    @pl.when(k == 0)
    def _init():
        acc_ref[...] = jnp.zeros_like(acc_ref)

    acc_ref[...] += jnp.dot(
        x_ref[...], w_ref[...], preferred_element_type=jnp.float32
    )

    @pl.when(k == j)
    def _diag():
        acc_ref[...] -= (
            x_ref[...].astype(jnp.float32) * diag_ref[...].astype(jnp.float32)
        )

    @pl.when(k == pl.num_programs(2) - 1)
    def _finalize():
        o_ref[...] = (
            acc_ref[...] + bias_ref[...].astype(jnp.float32)
        ).astype(o_ref.dtype)


def _round_up(a, b):
    return ((a + b - 1) // b) * b


def _pick_feature_tile(dim, preferred):
    """Largest multiple of 128 that divides `dim` and is <= preferred, else full dim."""
    if dim <= preferred:
        return dim
    t = (preferred // 128) * 128
    while t >= 128:
        if dim % t == 0:
            return t
        t -= 128
    return dim


def _vmem_budget_bytes():
    # Generation-aware budget: ~3/4 of physical VMEM, capped at 100 MiB.
    # v5e/v6e (128 MiB phys) -> 96 MiB; v7x (64 MiB phys) -> 48 MiB.
    phys = 128 << 20
    try:
        info = pltpu.get_tpu_info()
        phys = int(getattr(info, "vmem_capacity_bytes", phys)) or phys
    except Exception:
        pass
    return min((phys * 3) // 4, 100 << 20)


def linear_diagonal_weight_z(x, weight, bias, *, tm=None, tile=None):
    """x: (B, output_size), weight: (output_size, input_size), bias: (output_size,)."""
    B, K = x.shape
    Kw, N = weight.shape
    assert K == Kw, "x feature dim must match weight rows (output_size)"
    # bias (output_size,) broadcasts over the N output columns -> square layer.
    assert N == K, "Linear_diagonal_weight_z requires input_size == output_size"
    assert bias.shape == (N,)

    out_dtype = x.dtype
    x_isz = jnp.dtype(x.dtype).itemsize
    w_isz = jnp.dtype(weight.dtype).itemsize
    o_isz = jnp.dtype(out_dtype).itemsize

    vmem_budget = _vmem_budget_bytes()
    big_vmem = vmem_budget >= (80 << 20)

    # dtype-aware sublane granularity (f32: 8, bf16: 16, int8/fp8: 32).
    sub = max(8, 32 // x_isz)

    # Batch tile.
    if tm is None:
        tm = 512
    tm = min(tm, _round_up(B, sub))
    B_pad = _round_up(B, tm)

    # One feature tile shared by N and K (the diag fold requires tk == tn).
    if tile is None:
        if tm <= 32:
            tile = 2048 if big_vmem else 1024   # small-batch: amortize per-step overhead
        else:
            tile = 1024 if big_vmem else 512
    t = _pick_feature_tile(N, tile)

    # Megacore: guarantee >= 2 blocks over the 'parallel' grid axes when possible.
    if (B_pad // tm) * (N // t) < 2 and N % 256 == 0:
        t = _pick_feature_tile(N, max(128, (N // 2 // 128) * 128))

    use_scratch = jnp.dtype(out_dtype) != jnp.dtype(jnp.float32)

    def _footprint(tm_, t_):
        # double-buffered x, W, diag, bias, output (+ f32 scratch if used)
        f = 2 * (tm_ * t_ * x_isz + t_ * t_ * w_isz + 2 * t_ * w_isz + tm_ * t_ * o_isz)
        if use_scratch:
            f += tm_ * t_ * 4
        return f

    # Safety: shrink the feature tile if the footprint would crowd the budget.
    while _footprint(tm, t) > (vmem_budget * 3) // 5 and t > 128:
        new_t = _pick_feature_tile(N, max(128, t // 2))
        if new_t == t:
            break
        t = new_t
    # TODO(synk): for very large N/K that are not multiples of 128 the full-extent
    # fallback tile can still exceed the VMEM budget; pad N/K if that case arises.

    x_in = x if B_pad == B else jnp.pad(x, ((0, B_pad - B), (0, 0)))
    diag2d = jnp.diagonal(weight).reshape(1, N)
    bias2d = bias.reshape(1, N)

    grid = (B_pad // tm, N // t, K // t)

    # Accurate tiled HBM traffic: x replayed N/t times, W replayed B_pad/tm times.
    cost = pl.CostEstimate(
        flops=2 * B_pad * K * N,
        transcendentals=0,
        bytes_accessed=int(
            B_pad * K * (N // t) * x_isz            # x replays per N tile
            + K * N * (B_pad // tm) * w_isz          # W replays per batch tile
            + B_pad * N * o_isz                      # output write
            + 2 * N * w_isz * grid[0] * grid[2]      # diag + bias replays (tiny)
        ),
    )

    vmem_limit = int(min(max(2 * _footprint(tm, t), 32 << 20), vmem_budget))

    in_specs = [
        # x tile along the contraction axis (also supplies the diag term at k == j).
        pl.BlockSpec((tm, t), lambda i, j, k: (i, k)),
        # weight tile, streamed over (k, j).
        pl.BlockSpec((t, t), lambda i, j, k: (k, j)),
        # diagonal of W, (1, t) row aligned with the current N tile.
        pl.BlockSpec((1, t), lambda i, j, k: (0, j)),
        # bias, (1, t) row.
        pl.BlockSpec((1, t), lambda i, j, k: (0, j)),
    ]
    out_spec = pl.BlockSpec((tm, t), lambda i, j, k: (i, j))

    if use_scratch:
        kernel = _kernel_scratch_acc
        scratch_shapes = [pltpu.VMEM((tm, t), jnp.float32)]
    else:
        kernel = _kernel_out_acc
        scratch_shapes = []

    out = pl.pallas_call(
        kernel,
        out_shape=jax.ShapeDtypeStruct((B_pad, N), out_dtype),
        grid_spec=pltpu.PrefetchScalarGridSpec(
            num_scalar_prefetch=0,
            grid=grid,
            in_specs=in_specs,
            out_specs=out_spec,
            scratch_shapes=scratch_shapes,
        ),
        compiler_params=pltpu.CompilerParams(
            dimension_semantics=("parallel", "parallel", "arbitrary"),
            vmem_limit_bytes=vmem_limit,
        ),
        cost_estimate=cost,
    )(x_in, weight, diag2d, bias2d)

    return out if B_pad == B else out[:B]


def _reference(x, weight, bias):
    mask = 1.0 - jnp.eye(weight.shape[0], weight.shape[1], dtype=weight.dtype)
    return x @ (weight * mask) + bias


if __name__ == "__main__":
    key = jax.random.PRNGKey(0)

    # Case 1: small, aligned shapes (batch=8, size=128) -> single-tile grid.
    batch, size = 8, 128
    k_x, k_w, k_b, key = jax.random.split(key, 4)
    x = jax.random.normal(k_x, (batch, size), dtype=jnp.float32)
    weight = jax.random.normal(k_w, (size, size), dtype=jnp.float32) * 0.05
    bias = jax.random.normal(k_b, (size,), dtype=jnp.float32) * 0.1

    out = jax.block_until_ready(linear_diagonal_weight_z(x, weight, bias))
    ref = _reference(x, weight, bias)
    assert out.shape == (batch, size)
    assert jnp.allclose(out, ref, atol=1e-4, rtol=1e-4), "mismatch vs reference (case 1)"

    # Case 2: batch not divisible by the tile and N split into >=2 tiles
    # (exercises padding, the k == j diag fold, and the megacore split path).
    batch2, size2 = 5, 256
    k_x, k_w, k_b, key = jax.random.split(key, 4)
    x2 = jax.random.normal(k_x, (batch2, size2), dtype=jnp.float32)
    w2 = jax.random.normal(k_w, (size2, size2), dtype=jnp.float32) * 0.05
    b2 = jax.random.normal(k_b, (size2,), dtype=jnp.float32) * 0.1

    out2 = jax.block_until_ready(linear_diagonal_weight_z(x2, w2, b2))
    ref2 = _reference(x2, w2, b2)
    assert out2.shape == (batch2, size2)
    assert jnp.allclose(out2, ref2, atol=1e-4, rtol=1e-4), "mismatch vs reference (case 2)"

    # Case 3: bf16 inputs exercise the f32-scratch accumulator path.
    batch3, size3 = 16, 128
    k_x, k_w, k_b, key = jax.random.split(key, 4)
    x3 = jax.random.normal(k_x, (batch3, size3), dtype=jnp.float32).astype(jnp.bfloat16)
    w3 = (jax.random.normal(k_w, (size3, size3), dtype=jnp.float32) * 0.05).astype(jnp.bfloat16)
    b3 = (jax.random.normal(k_b, (size3,), dtype=jnp.float32) * 0.1).astype(jnp.bfloat16)

    out3 = jax.block_until_ready(linear_diagonal_weight_z(x3, w3, b3))
    ref3 = _reference(x3.astype(jnp.float32), w3.astype(jnp.float32), b3.astype(jnp.float32))
    assert out3.shape == (batch3, size3)
    assert jnp.allclose(out3.astype(jnp.float32), ref3, atol=5e-2, rtol=5e-2), (
        "mismatch vs reference (case 3)"
    )

    print("KERNEL_OK")
</pallas_src>

<mosaic_0001>
module attributes {stable_mosaic.version = 11 : i64} {
  func.func @_kernel_out_acc(%arg0: i32, %arg1: i32, %arg2: i32, %arg3: memref<8x128xf32, #tpu.memory_space<vmem>>, %arg4: memref<128x128xf32, #tpu.memory_space<vmem>>, %arg5: memref<1x128xf32, #tpu.memory_space<vmem>>, %arg6: memref<1x128xf32, #tpu.memory_space<vmem>>, %arg7: memref<8x128xf32, #tpu.memory_space<vmem>>) attributes {dimension_semantics = [#tpu.dimension_semantics<parallel>, #tpu.dimension_semantics<parallel>, #tpu.dimension_semantics<arbitrary>], iteration_bounds = array<i64: 1, 1, 1>, scalar_prefetch = 0 : i64, scratch_operands = 0 : i64, tpu.core_type = #tpu.core_type<tc>, window_params = [{transform_indices = @transform_0, window_bounds = array<i64: 8, 128>}, {transform_indices = @transform_1, window_bounds = array<i64: 128, 128>}, {transform_indices = @transform_2, window_bounds = array<i64: 1, 128>}, {transform_indices = @transform_3, window_bounds = array<i64: 1, 128>}, {transform_indices = @transform_4, window_bounds = array<i64: 8, 128>}]} {
    %c0_i32 = arith.constant 0 : i32
    %0 = arith.cmpi eq, %arg2, %c0_i32 : i32
    %1 = arith.extui %0 : i1 to i32
    %c0_i32_0 = arith.constant 0 : i32
    %2 = arith.cmpi ne, %1, %c0_i32_0 : i32
    scf.if %2 {
      %cst_11 = arith.constant 0.000000e+00 : f32
      %15 = vector.broadcast %cst_11 : f32 to vector<8x128xf32>
      %c0_12 = arith.constant 0 : index
      %c0_13 = arith.constant 0 : index
      %16 = vector.load %arg7[%c0_12, %c0_13] : memref<8x128xf32, #tpu.memory_space<vmem>>, vector<8x128xf32>
      tpu.vector_store %arg7[%c0_12, %c0_13], %15 {strides = array<i32>} : memref<8x128xf32, #tpu.memory_space<vmem>>, vector<8x128xf32>,
    } else {
    }
    %c0 = arith.constant 0 : index
    %c0_1 = arith.constant 0 : index
    %3 = vector.load %arg7[%c0, %c0_1] : memref<8x128xf32, #tpu.memory_space<vmem>>, vector<8x128xf32>
    %c0_2 = arith.constant 0 : index
    %c0_3 = arith.constant 0 : index
    %4 = vector.load %arg3[%c0_2, %c0_3] : memref<8x128xf32, #tpu.memory_space<vmem>>, vector<8x128xf32>
    %c0_4 = arith.constant 0 : index
    %c0_5 = arith.constant 0 : index
    %5 = vector.load %arg4[%c0_4, %c0_5] : memref<128x128xf32, #tpu.memory_space<vmem>>, vector<128x128xf32>
    %cst = arith.constant dense<0.000000e+00> : vector<8x128xf32>
    %6 = tpu.matmul %4, %5, %cst {dimension_numbers = #tpu.dot_dimension_numbers<[1], [0], [0], [1], [0, 0, 1, 1], [], []>} : vector<8x128xf32>, vector<128x128xf32>, vector<8x128xf32> -> vector<8x128xf32>
    %7 = arith.addf %3, %6 : vector<8x128xf32>
    %c0_6 = arith.constant 0 : index
    %c0_7 = arith.constant 0 : index
    %8 = vector.load %arg7[%c0_6, %c0_7] : memref<8x128xf32, #tpu.memory_space<vmem>>, vector<8x128xf32>
    tpu.vector_store %arg7[%c0_6, %c0_7], %7 {strides = array<i32>} : memref<8x128xf32, #tpu.memory_space<vmem>>, vector<8x128xf32>,
    %9 = arith.cmpi eq, %arg2, %arg1 : i32
    %10 = arith.extui %9 : i1 to i32
    %c0_i32_8 = arith.constant 0 : i32
    %11 = arith.cmpi ne, %10, %c0_i32_8 : i32
    scf.if %11 {
      %c0_11 = arith.constant 0 : index
      %c0_12 = arith.constant 0 : index
      %15 = vector.load %arg7[%c0_11, %c0_12] : memref<8x128xf32, #tpu.memory_space<vmem>>, vector<8x128xf32>
      %c0_13 = arith.constant 0 : index
      %c0_14 = arith.constant 0 : index
      %16 = vector.load %arg3[%c0_13, %c0_14] : memref<8x128xf32, #tpu.memory_space<vmem>>, vector<8x128xf32>
      %c0_15 = arith.constant 0 : index
      %c0_16 = arith.constant 0 : index
      %17 = vector.load %arg5[%c0_15, %c0_16] : memref<1x128xf32, #tpu.memory_space<vmem>>, vector<1x128xf32>
      %18 = vector.broadcast %17 : vector<1x128xf32> to vector<8x128xf32>
      %19 = arith.mulf %16, %18 : vector<8x128xf32>
      %20 = arith.subf %15, %19 : vector<8x128xf32>
      %c0_17 = arith.constant 0 : index
      %c0_18 = arith.constant 0 : index
      %21 = vector.load %arg7[%c0_17, %c0_18] : memref<8x128xf32, #tpu.memory_space<vmem>>, vector<8x128xf32>
      tpu.vector_store %arg7[%c0_17, %c0_18], %20 {strides = array<i32>} : memref<8x128xf32, #tpu.memory_space<vmem>>, vector<8x128xf32>,
    } else {
    }
    %c0_i32_9 = arith.constant 0 : i32
    %12 = arith.cmpi eq, %arg2, %c0_i32_9 : i32
    %13 = arith.extui %12 : i1 to i32
    %c0_i32_10 = arith.constant 0 : i32
    %14 = arith.cmpi ne, %13, %c0_i32_10 : i32
    scf.if %14 {
      %c0_11 = arith.constant 0 : index
      %c0_12 = arith.constant 0 : index
      %15 = vector.load %arg7[%c0_11, %c0_12] : memref<8x128xf32, #tpu.memory_space<vmem>>, vector<8x128xf32>
      %c0_13 = arith.constant 0 : index
      %c0_14 = arith.constant 0 : index
      %16 = vector.load %arg6[%c0_13, %c0_14] : memref<1x128xf32, #tpu.memory_space<vmem>>, vector<1x128xf32>
      %17 = vector.broadcast %16 : vector<1x128xf32> to vector<8x128xf32>
      %18 = arith.addf %15, %17 : vector<8x128xf32>
      %c0_15 = arith.constant 0 : index
      %c0_16 = arith.constant 0 : index
      %19 = vector.load %arg7[%c0_15, %c0_16] : memref<8x128xf32, #tpu.memory_space<vmem>>, vector<8x128xf32>
      tpu.vector_store %arg7[%c0_15, %c0_16], %18 {strides = array<i32>} : memref<8x128xf32, #tpu.memory_space<vmem>>, vector<8x128xf32>,
    } else {
    }
    return
  }
  func.func @transform_0(%arg0: i32, %arg1: i32, %arg2: i32) -> (i32, i32) {
    %c0_i32 = arith.constant 0 : i32
    return %arg0, %arg2 : i32, i32
  }
  func.func @transform_1(%arg0: i32, %arg1: i32, %arg2: i32) -> (i32, i32) {
    %c0_i32 = arith.constant 0 : i32
    return %arg2, %arg1 : i32, i32
  }
  func.func @transform_2(%arg0: i32, %arg1: i32, %arg2: i32) -> (i32, i32) {
    %c0_i32 = arith.constant 0 : i32
    %c0_i32_0 = arith.constant 0 : i32
    return %c0_i32, %arg1 : i32, i32
  }
  func.func @transform_3(%arg0: i32, %arg1: i32, %arg2: i32) -> (i32, i32) {
    %c0_i32 = arith.constant 0 : i32
    %c0_i32_0 = arith.constant 0 : i32
    return %c0_i32, %arg1 : i32, i32
  }
  func.func @transform_4(%arg0: i32, %arg1: i32, %arg2: i32) -> (i32, i32) {
    %c0_i32 = arith.constant 0 : i32
    return %arg0, %arg1 : i32, i32
  }
}

</mosaic_0001>

<llo_original>
// kernel: tpu_custom_call.1
$region0: #{tpu_custom_call.1}
  #allocation0 [shape = 'u32[]', space=smem, size = 0x4, offset = 0x4, fixed_abs, tag = 'smem constant byte address 0x4 - core index']
  #allocation1 [shape = 'u32[72,128]{1,0:T(1,128)}', space=vmem, size = 0x9000, scoped, tag = 'internal scratch']
  %s0 = inlined_call_operand.hbm [shape: f32[8,128], index: 0, kind: input, shape index: {}]
  %s1 = inlined_call_operand.hbm [shape: f32[128,128], index: 1, kind: input, shape index: {}]
  %s2 = inlined_call_operand.vmem [shape: f32[1,128], index: 2, kind: input, shape index: {}]
  %s3 = inlined_call_operand.vmem [shape: f32[1,128], index: 3, kind: input, shape index: {}]
  %s4 = inlined_call_operand.hbm [shape: f32[8,128], index: 4, kind: output, shape index: {}]
  %s5 = sld [smem:[#allocation0]]
  $region46: #{tpu_custom_call.1} parent=0
    _
  %s7 = ssub.s32 1, %s5
  %s8 = scalar_select 0, %s7, %s5
  $region1: #{tpu_custom_call.1} parent=0
    #allocation2 [shape = 'u8[4096]{0}', space=vmem, size = 0x1000, scoped, tag = 'input window, operand 0, single buffered']
    #allocation3 [shape = 's32[1]{0}', space=sflag, size = 0x4, scoped, tag = 'scoped memory for tpu_custom_call.1']
    #allocation4 [shape = 's32[1]{0}', space=sflag, size = 0x4, scoped, tag = 'scoped memory for tpu_custom_call.1']
    #allocation5 [shape = 'u8[65536]{0}', space=vmem, size = 0x10000, scoped, tag = 'input window, operand 1, single buffered']
    #allocation6 [shape = 's32[1]{0}', space=sflag, size = 0x4, scoped, tag = 'scoped memory for tpu_custom_call.1']
    #allocation7 [shape = 'u8[4096]{0}', space=vmem, size = 0x1000, scoped, tag = 'output window, operand 0, single buffered']
    %9 = vsyncpa [#allocation3], 0
    %10 = vsyncpa [#allocation6], 0
    %11 = vsyncpa [#allocation4], 0
    // Predicated region
    $region2: #{tpu_custom_call.1} parent=1 // pred_check
      _
    $region3: #{tpu_custom_call.1} parent=1 // pred_check_branch
      %13 = sbr.rel (0) target = $region5
    $region4: #{tpu_custom_call.1} parent=1 // pred_region
      %15 = vsyncadd [#allocation3], 0
      %s17 = sshll.u32 %s0, 4
      %s18 = int_to_ptr.hbm [resolvable:$true] %s17
      %s19 = sshll.u32 [#allocation2], 4
      %s20 = int_to_ptr.vmem [resolvable:$true] %s19
      %22 = dma.hbm_to_vmem [thread:$0]  %s18, 128, %s20, [#allocation3]
    $region5: #{tpu_custom_call.1} parent=1 // pred_fallthru
      _
    // Predicated region
    $region6: #{tpu_custom_call.1} parent=1 // pred_check
      _
    $region7: #{tpu_custom_call.1} parent=1 // pred_check_branch
      %24 = sbr.rel (0) target = $region9
    $region8: #{tpu_custom_call.1} parent=1 // pred_region
      %26 = vsyncadd [#allocation6], 0
      %s27 = sshll.u32 %s1, 4
      %s28 = int_to_ptr.hbm [resolvable:$true] %s27
      %s29 = sshll.u32 [#allocation5], 4
      %s30 = int_to_ptr.vmem [resolvable:$true] %s29
      %35 = dma.hbm_to_vmem [thread:$0]  %s28, 2048, %s30, [#allocation6], 128, 128, 8
    $region9: #{tpu_custom_call.1} parent=1 // pred_fallthru
      _
    // Predicated region
    $region10: #{tpu_custom_call.1} parent=1 // pred_check
      _
    $region11: #{tpu_custom_call.1} parent=1 // pred_check_branch
      %37 = sbr.rel (0) target = $region13
    $region12: #{tpu_custom_call.1} parent=1 // pred_region
      _
    $region13: #{tpu_custom_call.1} parent=1 // pred_fallthru
      _
    // Predicated region
    $region14: #{tpu_custom_call.1} parent=1 // pred_check
      _
    $region15: #{tpu_custom_call.1} parent=1 // pred_check_branch
      %39 = sbr.rel (0) target = $region17
    $region16: #{tpu_custom_call.1} parent=1 // pred_region
      _
    $region17: #{tpu_custom_call.1} parent=1 // pred_fallthru
      _
    // Predicated region
    $region18: #{tpu_custom_call.1} parent=1 // pred_check
      _
    $region19: #{tpu_custom_call.1} parent=1 // pred_check_branch
      %41 = sbr.rel (0) target = $region21
    $region20: #{tpu_custom_call.1} parent=1 // pred_region
      %43 = dma.done [#allocation3], 128
    $region21: #{tpu_custom_call.1} parent=1 // pred_fallthru
      _
    // Predicated region
    $region22: #{tpu_custom_call.1} parent=1 // pred_check
      _
    $region23: #{tpu_custom_call.1} parent=1 // pred_check_branch
      %45 = sbr.rel (0) target = $region25
    $region24: #{tpu_custom_call.1} parent=1 // pred_region
      %47 = dma.done [#allocation6], 2048
    $region25: #{tpu_custom_call.1} parent=1 // pred_fallthru
      _
    %p48 = scmp.eq.s32.totalorder 0, 0
    // Predicated region
    $region26: #{tpu_custom_call.1} parent=1 // pred_check
      %p49 = pneg %p48
    $region27: #{tpu_custom_call.1} parent=1 // pred_check_branch
      %51 = sbr.rel (%p49) target = $region29
    $region28: #{tpu_custom_call.1} parent=1 // pred_region
      %52 = vst [vmem:[#allocation7] sm:$0xff] 0.0
    $region29: #{tpu_custom_call.1} parent=1 // pred_fallthru
      _
    %v53 = vld [vmem:[#allocation7] sm:$0xff]
    %v54 = vld [vmem:[#allocation2] sm:$0xff]
    %v55 = vld [vmem:[#allocation5] sm:$0xff]
    %v56 = vld [vmem:[#allocation5 + $0x8] sm:$0xff]
    %v57 = vld [vmem:[#allocation5 + $0x10] sm:$0xff]
    %v58 = vld [vmem:[#allocation5 + $0x18] sm:$0xff]
    %v59 = vld [vmem:[#allocation5 + $0x20] sm:$0xff]
    %v60 = vld [vmem:[#allocation5 + $0x28] sm:$0xff]
    %v61 = vld [vmem:[#allocation5 + $0x30] sm:$0xff]
    %v62 = vld [vmem:[#allocation5 + $0x38] sm:$0xff]
    %v63 = vld [vmem:[#allocation5 + $0x40] sm:$0xff]
    %v64 = vld [vmem:[#allocation5 + $0x48] sm:$0xff]
    %v65 = vld [vmem:[#allocation5 + $0x50] sm:$0xff]
    %v66 = vld [vmem:[#allocation5 + $0x58] sm:$0xff]
    %v67 = vld [vmem:[#allocation5 + $0x60] sm:$0xff]
    %v68 = vld [vmem:[#allocation5 + $0x68] sm:$0xff]
    %v69 = vld [vmem:[#allocation5 + $0x70] sm:$0xff]
    %v70 = vld [vmem:[#allocation5 + $0x78] sm:$0xff]
    %71 = vmatpush.msra.mxu0 %v70
    %72 = vmatpush.msra.mxu0 %v69
    %73 = vmatpush.msra.mxu0 %v68
    %74 = vmatpush.msra.mxu0 %v67
    %75 = vmatpush.msra.mxu0 %v66
    %76 = vmatpush.msra.mxu0 %v65
    %77 = vmatpush.msra.mxu0 %v64
    %78 = vmatpush.msra.mxu0 %v63
    %79 = vmatpush.msra.mxu0 %v62
    %80 = vmatpush.msra.mxu0 %v61
    %81 = vmatpush.msra.mxu0 %v60
    %82 = vmatpush.msra.mxu0 %v59
    %83 = vmatpush.msra.mxu0 %v58
    %84 = vmatpush.msra.mxu0 %v57
    %85 = vmatpush.msra.mxu0 %v56
    %86 = vmatpush.msra.mxu0 %v55
    %87 = vmatmul.f32.gmra.mxu0 %v54
    %v88 = vpop.f32.mrf.mxu0
    %v89 = vadd.f32 0.0, %v88
    %90 = vdwg.mxu0
    %v91 = vadd.f32 %v53, %v89
    %92 = vst [vmem:[#allocation7] sm:$0xff] %v91
    %p93 = scmp.eq.s32.totalorder 0, 0
    // Predicated region
    $region30: #{tpu_custom_call.1} parent=1 // pred_check
      %p94 = pneg %p93
    $region31: #{tpu_custom_call.1} parent=1 // pred_check_branch
      %96 = sbr.rel (%p94) target = $region33
    $region32: #{tpu_custom_call.1} parent=1 // pred_region
      %v97 = vld [vmem:[#allocation7] sm:$0xff]
      %v98 = vld [vmem:[#allocation2] sm:$0xff]
      %v99 = vld [vmem:[%s2] sm:$0x1]
      %v101 = vperm.slane %v99, 0
      %v103 = vmul.f32 %v98, %v101
      %v104 = vsub.f32 %v97, %v103
      %105 = vst [vmem:[#allocation7] sm:$0xff] %v104
    $region33: #{tpu_custom_call.1} parent=1 // pred_fallthru
      _
    // Predicated region
    $region34: #{tpu_custom_call.1} parent=1 // pred_check
      %p106 = pneg %p48
    $region35: #{tpu_custom_call.1} parent=1 // pred_check_branch
      %108 = sbr.rel (%p106) target = $region37
    $region36: #{tpu_custom_call.1} parent=1 // pred_region
      %v109 = vld [vmem:[#allocation7] sm:$0xff]
      %v110 = vld [vmem:[%s3] sm:$0x1]
      %v112 = vperm.slane %v110, 0
      %v114 = vadd.f32 %v109, %v112
      %115 = vst [vmem:[#allocation7] sm:$0xff] %v114
    $region37: #{tpu_custom_call.1} parent=1 // pred_fallthru
      _
    // Predicated region
    $region38: #{tpu_custom_call.1} parent=1 // pred_check
      _
    $region39: #{tpu_custom_call.1} parent=1 // pred_check_branch
      %117 = sbr.rel (0) target = $region41
    $region40: #{tpu_custom_call.1} parent=1 // pred_region
      %119 = vsyncadd [#allocation4], 0
      %s121 = sshll.u32 [#allocation7], 4
      %s122 = int_to_ptr.vmem [resolvable:$true] %s121
      %s123 = sshll.u32 %s4, 4
      %s124 = int_to_ptr.hbm [resolvable:$true] %s123
      %126 = dma.vmem_to_hbm [thread:$0]  %s122, 128, %s124, [#allocation4]
    $region41: #{tpu_custom_call.1} parent=1 // pred_fallthru
      _
    // Predicated region
    $region42: #{tpu_custom_call.1} parent=1 // pred_check
      _
    $region43: #{tpu_custom_call.1} parent=1 // pred_check_branch
      %128 = sbr.rel (0) target = $region45
    $region44: #{tpu_custom_call.1} parent=1 // pred_region
      %130 = dma.done [#allocation4], 128
    $region45: #{tpu_custom_call.1} parent=1 // pred_fallthru
      _
    %131 = vsyncpa [#allocation3], 1
    %132 = vsyncpa [#allocation6], 1
    %133 = vsyncpa [#allocation4], 1

</llo_original>
